<compile_context>
chip_gen: v5e
topology: v5e:2x2
jax: 0.10.0
libtpu: 0.0.40
codegen_flags: <defaults>
</compile_context>

<pallas_src>
import jax
import jax.numpy as jnp
from jax.experimental import pallas as pl
from jax.experimental.pallas import tpu as pltpu


_VMEM_BUDGET = 40 * 1024 * 1024   # sizing budget (safe on v7x's 64 MiB VMEM)
_VMEM_LIMIT = 48 * 1024 * 1024    # scoped VMEM limit handed to Mosaic


def _round_up(x, m):
    return (x + m - 1) // m * m


def _vmem_estimate(tb, tm, dp, mm_bytes):
    """Rough per-step VMEM working set (double-buffered inputs + f32 temps)."""
    return (2 * tb * dp * mm_bytes        # anchors (resident across mj, 2 bufs)
            + 2 * tm * dp * mm_bytes      # candidate tile (2 bufs)
            + 4 * tb * tm * 4             # (TB, TM) f32 scores + exp temporaries
            + 2 * tm * 4                  # pad-mask bias row
            + 8 * tb * 4)                 # pos column, output, m/l scratch


def _mnrl_kernel(a_ref, pos_ref, bias_ref, b_ref, loss_ref, m_sc, l_sc):
    """One (B-tile, M-tile) step.  grid = (nb, nm); nm is the reduction axis.

    a_ref    : (TB, Dp)  normalized anchors with `scale` folded in (mm_dtype)
    pos_ref  : (TB, 1)   precomputed positive (diagonal) scores, f32
    bias_ref : (1, TM)   0 for valid candidate columns, -1e30 for padding, f32
    b_ref    : (TM, Dp)  normalized candidates (mm_dtype)
    loss_ref : (TB, 1)   per-row loss = logsumexp(scores) - positive score
    m_sc/l_sc: (TB, 1)   online-logsumexp running max / running sum-exp
    """
    mj = pl.program_id(1)

    # ---- per-B-tile prologue: reset the online-LSE accumulators ----
    @pl.when(mj == 0)
    def _init():
        m_sc[...] = jnp.full(m_sc.shape, -jnp.inf, jnp.float32)
        l_sc[...] = jnp.zeros_like(l_sc)

    # ---- scores: bf16 NT matmul on the MXU, f32 accumulation ----
    s = jax.lax.dot_general(
        a_ref[...], b_ref[...],
        dimension_numbers=(((1,), (1,)), ((), ())),
        preferred_element_type=jnp.float32)          # (TB, TM), already scaled
    # Additive mask for padded candidate columns (every M tile contains at
    # least one valid column, so m_new stays finite and exp() never sees NaN).
    s = s + bias_ref[...]

    # ---- online logsumexp update ----
    m_prev = m_sc[...]
    m_new = jnp.maximum(m_prev, jnp.max(s, axis=-1, keepdims=True))
    l_sc[...] = (l_sc[...] * jnp.exp(m_prev - m_new)
                 + jnp.sum(jnp.exp(s - m_new), axis=-1, keepdims=True))
    m_sc[...] = m_new

    # ---- finalize: per-row cross-entropy = logsumexp - positive score ----
    @pl.when(mj == pl.num_programs(1) - 1)
    def _fin():
        loss_ref[...] = jnp.log(l_sc[...]) + m_sc[...] - pos_ref[...]


def multiple_negatives_ranking_loss(reps, scale=20.0, *, tb=256, tm=1024,
                                    mm_dtype=jnp.bfloat16):
    """reps: list of (B, D) arrays; reps[0] anchors, reps[1] positives,
    reps[2:] optional hard negatives.  Returns the scalar mean CE loss,
    matching the PyTorch module (cos_sim * scale, labels = arange(B))."""
    a = reps[0]
    p = reps[1]
    assert p.shape[0] == a.shape[0], "reps[1] must hold one positive per anchor"
    cand = p if len(reps) == 2 else jnp.concatenate(reps[1:], axis=0)
    # TODO(synk): for len(reps) > 2 the concat is still one extra HBM pass over
    # the candidates; a scalar-prefetch + pl.ANY manual-DMA preprocessing
    # kernel could stream each rep directly into the normalized buffer.

    B, D = a.shape
    M = cand.shape[0]
    eps2 = 1e-24  # (torch F.normalize eps=1e-12) ** 2

    # ---- one-pass preprocessing (fused by XLA): normalize, fold the
    # ---- temperature into the anchors, positive scores, cast to MXU dtype ----
    a32 = a.astype(jnp.float32)
    p32 = p.astype(jnp.float32)
    c32 = cand.astype(jnp.float32)
    a_n = a32 * (float(scale) * jax.lax.rsqrt(
        jnp.maximum(jnp.sum(a32 * a32, axis=-1, keepdims=True), eps2)))
    p_n = p32 * jax.lax.rsqrt(
        jnp.maximum(jnp.sum(p32 * p32, axis=-1, keepdims=True), eps2))
    c_n = c32 * jax.lax.rsqrt(
        jnp.maximum(jnp.sum(c32 * c32, axis=-1, keepdims=True), eps2))
    pos = jnp.sum(a_n * p_n, axis=-1, keepdims=True)            # (B, 1) f32

    # ---- tile sizing ----
    mm_bytes = jnp.dtype(mm_dtype).itemsize
    TB = min(int(tb), _round_up(B, 8))
    Dp = _round_up(D, 128)
    Bp = _round_up(B, TB)
    nb = Bp // TB

    TM = min(int(tm), _round_up(M, 128))
    while TM > 128 and _vmem_estimate(TB, TM, Dp, mm_bytes) > _VMEM_BUDGET:
        TM = max(128, _round_up(TM // 2, 128))
    if nb > 1:
        # Candidate residency: if the whole normalized candidate set fits the
        # VMEM budget, use a single M tile; its block index is then constant
        # across the grid, so Pallas DMAs it from HBM exactly once.
        m_full = _round_up(M, 128)
        if _vmem_estimate(TB, m_full, Dp, mm_bytes) <= _VMEM_BUDGET:
            TM = m_full
    Mp = _round_up(M, TM)
    nm = Mp // TM
    # TODO(synk): on v7x with nb == 1 the second TensorCore idles; splitting
    # the M axis across cores with per-core partial (m, l) accumulators and a
    # wrapper-side log-sum-exp combine would recover the 2x.

    # ---- zero-pad to lane/sublane-friendly shapes (layout plumbing only) ----
    a_pad = jnp.zeros((Bp, Dp), mm_dtype).at[:B, :D].set(a_n.astype(mm_dtype))
    c_pad = jnp.zeros((Mp, Dp), mm_dtype).at[:M, :D].set(c_n.astype(mm_dtype))
    pos_pad = jnp.zeros((Bp, 1), jnp.float32).at[:B].set(pos)
    col = jnp.arange(Mp, dtype=jnp.int32)[None, :]
    bias = jnp.where(col < M, 0.0, -1e30).astype(jnp.float32)   # (1, Mp)

    per_row = pl.pallas_call(
        _mnrl_kernel,
        out_shape=jax.ShapeDtypeStruct((Bp, 1), jnp.float32),
        grid=(nb, nm),
        in_specs=[
            pl.BlockSpec((TB, Dp), lambda bi, mj: (bi, 0)),   # anchors (scaled)
            pl.BlockSpec((TB, 1), lambda bi, mj: (bi, 0)),    # positive scores
            pl.BlockSpec((1, TM), lambda bi, mj: (0, mj)),    # pad-mask bias
            pl.BlockSpec((TM, Dp), lambda bi, mj: (mj, 0)),   # candidates
        ],
        out_specs=pl.BlockSpec((TB, 1), lambda bi, mj: (bi, 0)),
        scratch_shapes=[
            pltpu.VMEM((TB, 1), jnp.float32),   # running max
            pltpu.VMEM((TB, 1), jnp.float32),   # running sum-exp
        ],
        compiler_params=pltpu.CompilerParams(
            dimension_semantics=("parallel", "arbitrary"),
            vmem_limit_bytes=_VMEM_LIMIT,
        ),
    )(a_pad, pos_pad, bias, c_pad)

    # Padded rows are never read (slice below), so no in-kernel row mask.
    return jnp.sum(per_row[:B, 0]) / B


def _reference_loss(reps, scale=20.0):
    # Pure-JAX reference mirroring the PyTorch module semantics.
    a = reps[0].astype(jnp.float32)
    b = jnp.concatenate(reps[1:], axis=0).astype(jnp.float32)
    a_n = a / jnp.maximum(jnp.linalg.norm(a, axis=-1, keepdims=True), 1e-12)
    b_n = b / jnp.maximum(jnp.linalg.norm(b, axis=-1, keepdims=True), 1e-12)
    scores = a_n @ b_n.T * scale
    labels = jnp.arange(scores.shape[0])
    logp = jax.nn.log_softmax(scores, axis=-1)
    return -jnp.mean(logp[labels, labels])


if __name__ == "__main__":
    key = jax.random.PRNGKey(0)
    k_a, k_p, k_n = jax.random.split(key, 3)

    B, D = 8, 32  # batch of sentence pairs, hidden size
    anchors = jax.random.normal(k_a, (B, D), dtype=jnp.float32)
    positives = jax.random.normal(k_p, (B, D), dtype=jnp.float32)
    hard_negs = jax.random.normal(k_n, (B, D), dtype=jnp.float32)
    reps = [anchors, positives, hard_negs]

    ref = _reference_loss(reps, scale=20.0)

    # Default path: bf16 MXU operands, f32 accumulation / softmax math.
    loss_bf16 = jax.block_until_ready(
        multiple_negatives_ranking_loss(reps, scale=20.0))
    assert jnp.allclose(loss_bf16, ref, atol=5e-2, rtol=5e-2), (loss_bf16, ref)

    # Full-precision opt-out path (tight tolerance vs. the reference).
    loss_f32 = jax.block_until_ready(
        multiple_negatives_ranking_loss(reps, scale=20.0, mm_dtype=jnp.float32))
    assert jnp.allclose(loss_f32, ref, atol=5e-4, rtol=5e-4), (loss_f32, ref)

    print("KERNEL_OK")
</pallas_src>

<mosaic_0001>
module attributes {stable_mosaic.version = 11 : i64} {
  func.func @_mnrl_kernel(%arg0: i32, %arg1: i32, %arg2: memref<8x128xbf16, #tpu.memory_space<vmem>>, %arg3: memref<8x1xf32, #tpu.memory_space<vmem>>, %arg4: memref<1x128xf32, #tpu.memory_space<vmem>>, %arg5: memref<128x128xbf16, #tpu.memory_space<vmem>>, %arg6: memref<8x1xf32, #tpu.memory_space<vmem>>, %arg7: memref<8x1xf32, #tpu.memory_space<vmem>>, %arg8: memref<8x1xf32, #tpu.memory_space<vmem>>) attributes {dimension_semantics = [#tpu.dimension_semantics<parallel>, #tpu.dimension_semantics<arbitrary>], iteration_bounds = array<i64: 1, 1>, scalar_prefetch = 0 : i64, scratch_operands = 2 : i64, tpu.core_type = #tpu.core_type<tc>, window_params = [{transform_indices = @transform_0, window_bounds = array<i64: 8, 128>}, {transform_indices = @transform_1, window_bounds = array<i64: 8, 1>}, {transform_indices = @transform_2, window_bounds = array<i64: 1, 128>}, {transform_indices = @transform_3, window_bounds = array<i64: 128, 128>}, {transform_indices = @transform_4, window_bounds = array<i64: 8, 1>}]} {
    %c0_i32 = arith.constant 0 : i32
    %0 = arith.cmpi eq, %arg1, %c0_i32 : i32
    %1 = arith.extui %0 : i1 to i32
    %c0_i32_0 = arith.constant 0 : i32
    %2 = arith.cmpi ne, %1, %c0_i32_0 : i32
    scf.if %2 {
      %cst_18 = arith.constant 0xFF800000 : f32
      %28 = vector.broadcast %cst_18 : f32 to vector<8x1xf32>
      %c0_19 = arith.constant 0 : index
      %c0_20 = arith.constant 0 : index
      %29 = vector.load %arg7[%c0_19, %c0_20] : memref<8x1xf32, #tpu.memory_space<vmem>>, vector<8x1xf32>
      tpu.vector_store %arg7[%c0_19, %c0_20], %28 {strides = array<i32>} : memref<8x1xf32, #tpu.memory_space<vmem>>, vector<8x1xf32>,
      %cst_21 = arith.constant 0.000000e+00 : f32
      %30 = vector.broadcast %cst_21 : f32 to vector<8x1xf32>
      %c0_22 = arith.constant 0 : index
      %c0_23 = arith.constant 0 : index
      %31 = vector.load %arg8[%c0_22, %c0_23] : memref<8x1xf32, #tpu.memory_space<vmem>>, vector<8x1xf32>
      tpu.vector_store %arg8[%c0_22, %c0_23], %30 {strides = array<i32>} : memref<8x1xf32, #tpu.memory_space<vmem>>, vector<8x1xf32>,
    } else {
    }
    %c0 = arith.constant 0 : index
    %c0_1 = arith.constant 0 : index
    %3 = vector.load %arg2[%c0, %c0_1] : memref<8x128xbf16, #tpu.memory_space<vmem>>, vector<8x128xbf16>
    %c0_2 = arith.constant 0 : index
    %c0_3 = arith.constant 0 : index
    %4 = vector.load %arg5[%c0_2, %c0_3] : memref<128x128xbf16, #tpu.memory_space<vmem>>, vector<128x128xbf16>
    %cst = arith.constant dense<0.000000e+00> : vector<8x128xf32>
    %5 = tpu.matmul %3, %4, %cst {dimension_numbers = #tpu.dot_dimension_numbers<[1], [1], [0], [0], [0, 0, 1, 0], [], []>} : vector<8x128xbf16>, vector<128x128xbf16>, vector<8x128xf32> -> vector<8x128xf32>
    %c0_4 = arith.constant 0 : index
    %c0_5 = arith.constant 0 : index
    %6 = vector.load %arg4[%c0_4, %c0_5] : memref<1x128xf32, #tpu.memory_space<vmem>>, vector<1x128xf32>
    %7 = vector.broadcast %6 : vector<1x128xf32> to vector<8x128xf32>
    %8 = arith.addf %5, %7 : vector<8x128xf32>
    %c0_6 = arith.constant 0 : index
    %c0_7 = arith.constant 0 : index
    %9 = vector.load %arg7[%c0_6, %c0_7] : memref<8x1xf32, #tpu.memory_space<vmem>>, vector<8x1xf32>
    %cst_8 = arith.constant dense<0xFF800000> : vector<8xf32>
    %10 = vector.multi_reduction <maximumf>, %8, %cst_8 [1] : vector<8x128xf32> to vector<8xf32>
    %11 = vector.shape_cast %10 : vector<8xf32> to vector<8x1xf32>
    %12 = arith.maximumf %9, %11 : vector<8x1xf32>
    %c0_9 = arith.constant 0 : index
    %c0_10 = arith.constant 0 : index
    %13 = vector.load %arg8[%c0_9, %c0_10] : memref<8x1xf32, #tpu.memory_space<vmem>>, vector<8x1xf32>
    %14 = arith.subf %9, %12 : vector<8x1xf32>
    %15 = math.exp %14 : vector<8x1xf32>
    %16 = arith.mulf %13, %15 : vector<8x1xf32>
    %17 = vector.broadcast %12 : vector<8x1xf32> to vector<8x128xf32>
    %18 = arith.subf %8, %17 : vector<8x128xf32>
    %19 = math.exp %18 : vector<8x128xf32>
    %cst_11 = arith.constant dense<0.000000e+00> : vector<8xf32>
    %20 = vector.multi_reduction <add>, %19, %cst_11 [1] : vector<8x128xf32> to vector<8xf32>
    %21 = vector.shape_cast %20 : vector<8xf32> to vector<8x1xf32>
    %22 = arith.addf %16, %21 : vector<8x1xf32>
    %c0_12 = arith.constant 0 : index
    %c0_13 = arith.constant 0 : index
    %23 = vector.load %arg8[%c0_12, %c0_13] : memref<8x1xf32, #tpu.memory_space<vmem>>, vector<8x1xf32>
    tpu.vector_store %arg8[%c0_12, %c0_13], %22 {strides = array<i32>} : memref<8x1xf32, #tpu.memory_space<vmem>>, vector<8x1xf32>,
    %c0_14 = arith.constant 0 : index
    %c0_15 = arith.constant 0 : index
    %24 = vector.load %arg7[%c0_14, %c0_15] : memref<8x1xf32, #tpu.memory_space<vmem>>, vector<8x1xf32>
    tpu.vector_store %arg7[%c0_14, %c0_15], %12 {strides = array<i32>} : memref<8x1xf32, #tpu.memory_space<vmem>>, vector<8x1xf32>,
    %c0_i32_16 = arith.constant 0 : i32
    %25 = arith.cmpi eq, %arg1, %c0_i32_16 : i32
    %26 = arith.extui %25 : i1 to i32
    %c0_i32_17 = arith.constant 0 : i32
    %27 = arith.cmpi ne, %26, %c0_i32_17 : i32
    scf.if %27 {
      %c0_18 = arith.constant 0 : index
      %c0_19 = arith.constant 0 : index
      %28 = vector.load %arg8[%c0_18, %c0_19] : memref<8x1xf32, #tpu.memory_space<vmem>>, vector<8x1xf32>
      %29 = math.log %28 : vector<8x1xf32>
      %c0_20 = arith.constant 0 : index
      %c0_21 = arith.constant 0 : index
      %30 = vector.load %arg7[%c0_20, %c0_21] : memref<8x1xf32, #tpu.memory_space<vmem>>, vector<8x1xf32>
      %31 = arith.addf %29, %30 : vector<8x1xf32>
      %c0_22 = arith.constant 0 : index
      %c0_23 = arith.constant 0 : index
      %32 = vector.load %arg3[%c0_22, %c0_23] : memref<8x1xf32, #tpu.memory_space<vmem>>, vector<8x1xf32>
      %33 = arith.subf %31, %32 : vector<8x1xf32>
      %c0_24 = arith.constant 0 : index
      %c0_25 = arith.constant 0 : index
      %34 = vector.load %arg6[%c0_24, %c0_25] : memref<8x1xf32, #tpu.memory_space<vmem>>, vector<8x1xf32>
      tpu.vector_store %arg6[%c0_24, %c0_25], %33 {strides = array<i32>} : memref<8x1xf32, #tpu.memory_space<vmem>>, vector<8x1xf32>,
    } else {
    }
    return
  }
  func.func @transform_0(%arg0: i32, %arg1: i32) -> (i32, i32) {
    %c0_i32 = arith.constant 0 : i32
    %c0_i32_0 = arith.constant 0 : i32
    return %arg0, %c0_i32 : i32, i32
  }
  func.func @transform_1(%arg0: i32, %arg1: i32) -> (i32, i32) {
    %c0_i32 = arith.constant 0 : i32
    %c0_i32_0 = arith.constant 0 : i32
    return %arg0, %c0_i32 : i32, i32
  }
  func.func @transform_2(%arg0: i32, %arg1: i32) -> (i32, i32) {
    %c0_i32 = arith.constant 0 : i32
    %c0_i32_0 = arith.constant 0 : i32
    return %c0_i32, %arg1 : i32, i32
  }
  func.func @transform_3(%arg0: i32, %arg1: i32) -> (i32, i32) {
    %c0_i32 = arith.constant 0 : i32
    %c0_i32_0 = arith.constant 0 : i32
    return %arg1, %c0_i32 : i32, i32
  }
  func.func @transform_4(%arg0: i32, %arg1: i32) -> (i32, i32) {
    %c0_i32 = arith.constant 0 : i32
    %c0_i32_0 = arith.constant 0 : i32
    return %arg0, %c0_i32 : i32, i32
  }
}

</mosaic_0001>

<llo_original>
// kernel: tpu_custom_call.1
$region0: #{tpu_custom_call.1}
  #allocation0 [shape = 'u32[]', space=smem, size = 0x4, offset = 0x4, fixed_abs, tag = 'smem constant byte address 0x4 - core index']
  #allocation1 [shape = 'u32[72,128]{1,0:T(1,128)}', space=vmem, size = 0x9000, scoped, tag = 'internal scratch']
  #allocation2 [shape = 'f32[8,1]{1,0:T(8,128)}', space=vmem, size = 0x1000, scoped, tag = 'scratch operand']
  #allocation3 [shape = 'f32[8,1]{1,0:T(8,128)}', space=vmem, size = 0x1000, scoped, tag = 'scratch operand']
  %s0 = inlined_call_operand.vmem [shape: bf16[8,128], index: 0, kind: input, shape index: {}]
  %s1 = inlined_call_operand.vmem [shape: f32[8,1], index: 1, kind: input, shape index: {}]
  %s2 = inlined_call_operand.vmem [shape: f32[1,128], index: 2, kind: input, shape index: {}]
  %s3 = inlined_call_operand.hbm [shape: bf16[128,128], index: 3, kind: input, shape index: {}]
  %s4 = inlined_call_operand.vmem [shape: f32[8,1], index: 4, kind: output, shape index: {}]
  %s5 = sld [smem:[#allocation0]]
  $region38: #{tpu_custom_call.1} parent=0
    _
  %s7 = ssub.s32 1, %s5
  %s8 = scalar_select 0, %s7, %s5
  $region1: #{tpu_custom_call.1} parent=0
    #allocation4 [shape = 'u8[32768]{0}', space=vmem, size = 0x8000, scoped, tag = 'input window, operand 3, single buffered']
    #allocation5 [shape = 's32[1]{0}', space=sflag, size = 0x4, scoped, tag = 'scoped memory for tpu_custom_call.1']
    %9 = vsyncpa [#allocation5], 0
    // Predicated region
    $region2: #{tpu_custom_call.1} parent=1 // pred_check
      _
    $region3: #{tpu_custom_call.1} parent=1 // pred_check_branch
      %11 = sbr.rel (0) target = $region5
    $region4: #{tpu_custom_call.1} parent=1 // pred_region
      _
    $region5: #{tpu_custom_call.1} parent=1 // pred_fallthru
      _
    // Predicated region
    $region6: #{tpu_custom_call.1} parent=1 // pred_check
      _
    $region7: #{tpu_custom_call.1} parent=1 // pred_check_branch
      %13 = sbr.rel (0) target = $region9
    $region8: #{tpu_custom_call.1} parent=1 // pred_region
      _
    $region9: #{tpu_custom_call.1} parent=1 // pred_fallthru
      _
    // Predicated region
    $region10: #{tpu_custom_call.1} parent=1 // pred_check
      _
    $region11: #{tpu_custom_call.1} parent=1 // pred_check_branch
      %15 = sbr.rel (0) target = $region13
    $region12: #{tpu_custom_call.1} parent=1 // pred_region
      _
    $region13: #{tpu_custom_call.1} parent=1 // pred_fallthru
      _
    // Predicated region
    $region14: #{tpu_custom_call.1} parent=1 // pred_check
      _
    $region15: #{tpu_custom_call.1} parent=1 // pred_check_branch
      %17 = sbr.rel (0) target = $region17
    $region16: #{tpu_custom_call.1} parent=1 // pred_region
      %19 = vsyncadd [#allocation5], 0
      %s20 = sshll.u32 %s3, 4
      %s21 = int_to_ptr.hbm [resolvable:$true] %s20
      %s22 = sshll.u32 [#allocation4], 4
      %s23 = int_to_ptr.vmem [resolvable:$true] %s22
      %28 = dma.hbm_to_vmem [thread:$0]  %s21, 1024, %s23, [#allocation5], 64, 64, 4
    $region17: #{tpu_custom_call.1} parent=1 // pred_fallthru
      _
    // Predicated region
    $region18: #{tpu_custom_call.1} parent=1 // pred_check
      _
    $region19: #{tpu_custom_call.1} parent=1 // pred_check_branch
      %30 = sbr.rel (0) target = $region21
    $region20: #{tpu_custom_call.1} parent=1 // pred_region
      %32 = dma.done [#allocation5], 1024
    $region21: #{tpu_custom_call.1} parent=1 // pred_fallthru
      _
    %p33 = scmp.eq.s32.totalorder 0, 0
    // Predicated region
    $region22: #{tpu_custom_call.1} parent=1 // pred_check
      %p34 = pneg %p33
    $region23: #{tpu_custom_call.1} parent=1 // pred_check_branch
      %36 = sbr.rel (%p34) target = $region25
    $region24: #{tpu_custom_call.1} parent=1 // pred_region
      %vm37 = vcmask 7168
      %38 = vst.msk [vmem:[#allocation2] sm:$0xff] %vm37, -inf
      %39 = vst.msk [vmem:[#allocation3] sm:$0xff] %vm37, 0.0
    $region25: #{tpu_custom_call.1} parent=1 // pred_fallthru
      _
    %v40 = vld [vmem:[%s0] sm:$0xf]
    %v41 = vld [vmem:[#allocation4] sm:$0xf]
    %v42 = vld [vmem:[#allocation4 + $0x4] sm:$0xf]
    %v43 = vld [vmem:[#allocation4 + $0x8] sm:$0xf]
    %v44 = vld [vmem:[#allocation4 + $0xc] sm:$0xf]
    %v45 = vld [vmem:[#allocation4 + $0x10] sm:$0xf]
    %v46 = vld [vmem:[#allocation4 + $0x14] sm:$0xf]
    %v47 = vld [vmem:[#allocation4 + $0x18] sm:$0xf]
    %v48 = vld [vmem:[#allocation4 + $0x1c] sm:$0xf]
    %v49 = vld [vmem:[#allocation4 + $0x20] sm:$0xf]
    %v50 = vld [vmem:[#allocation4 + $0x24] sm:$0xf]
    %v51 = vld [vmem:[#allocation4 + $0x28] sm:$0xf]
    %v52 = vld [vmem:[#allocation4 + $0x2c] sm:$0xf]
    %v53 = vld [vmem:[#allocation4 + $0x30] sm:$0xf]
    %v54 = vld [vmem:[#allocation4 + $0x34] sm:$0xf]
    %v55 = vld [vmem:[#allocation4 + $0x38] sm:$0xf]
    %v56 = vld [vmem:[#allocation4 + $0x3c] sm:$0xf]
    %v57 = vld [vmem:[%s2] sm:$0x1]
    %v59 = vperm.slane %v57, 0
    %v77 = vunpack.c.l.b16 %v41
    %v78 = vunpack.c.l.b16 %v42
    %v79 = vunpack.c.l.b16 %v43
    %v80 = vunpack.c.l.b16 %v44
    %v81 = vunpack.c.l.b16 %v45
    %v82 = vunpack.c.l.b16 %v46
    %v83 = vunpack.c.l.b16 %v47
    %v84 = vunpack.c.l.b16 %v48
    %v85 = vunpack.c.l.b16 %v49
    %v86 = vunpack.c.l.b16 %v50
    %v87 = vunpack.c.l.b16 %v51
    %v88 = vunpack.c.l.b16 %v52
    %v89 = vunpack.c.l.b16 %v53
    %v90 = vunpack.c.l.b16 %v54
    %v91 = vunpack.c.l.b16 %v55
    %v92 = vunpack.c.l.b16 %v56
    %v93 = vpack.c.b16 %v78, %v77
    %v94 = vpack.c.b16 %v80, %v79
    %v95 = vpack.c.b16 %v82, %v81
    %v96 = vpack.c.b16 %v84, %v83
    %v97 = vpack.c.b16 %v86, %v85
    %v98 = vpack.c.b16 %v88, %v87
    %v99 = vpack.c.b16 %v90, %v89
    %v100 = vpack.c.b16 %v92, %v91
    %109 = vmatpush.bf16.xpose.msra.mxu0 %v100
    %110 = vmatpush.bf16.xpose.msra.mxu0 %v99
    %111 = vmatpush.bf16.xpose.msra.mxu0 %v98
    %112 = vmatpush.bf16.xpose.msra.mxu0 %v97
    %113 = vmatpush.bf16.xpose.msra.mxu0 %v96
    %114 = vmatpush.bf16.xpose.msra.mxu0 %v95
    %115 = vmatpush.bf16.xpose.msra.mxu0 %v94
    %116 = vmatpush.bf16.xpose.msra.mxu0 %v93
    %117 = vmatmul.bf16.gmra.mxu0 %v40
    %v118 = vpop.f32.mrf.mxu0
    %v119 = vadd.f32 %v59, %v118
    %v120 = vpop.f32.mrf.mxu0
    %121 = vdwg.mxu0
    %v122 = vld [vmem:[#allocation2] sm:$0xff]
    %123 = vmax.xlane.f32.xlu0 %v119
    %v124 = vpop.xlane.xlu0 %123
    %v125 = vmax.f32 %v122, %v124
    %v126 = vld [vmem:[#allocation3] sm:$0xff]
    %v127 = vsub.f32 %v122, %v125
    %v128 = vmul.f32 %v127, 1.442695
    %v129 = vpow.pop %v128
    %v130 = vmul.f32 %v126, %v129
    %132 = vset.pattern.permute.xlu0 0
    %133 = vperm.xlu0 %132, %v125
    %v134 = vpop.permute.xlu0 %133
    %v136 = vsub.f32 %v119, %v134
    %v137 = vmul.f32 %v136, 1.442695
    %v138 = vpow.pop %v137
    %139 = vadd.xlane.f32.xlu0 %v138
    %v140 = vpop.xlane.xlu0 %139
    %v141 = vadd.f32 %v130, %v140
    %vm142 = vcmask 7168
    %143 = vst.msk [vmem:[#allocation3] sm:$0xff] %vm142, %v141
    %144 = vst.msk [vmem:[#allocation2] sm:$0xff] %vm142, %v125
    // Predicated region
    $region26: #{tpu_custom_call.1} parent=1 // pred_check
      %p145 = pneg %p33
    $region27: #{tpu_custom_call.1} parent=1 // pred_check_branch
      %147 = sbr.rel (%p145) target = $region29
    $region28: #{tpu_custom_call.1} parent=1 // pred_region
      %v148 = vld [vmem:[#allocation3] sm:$0xff]
      %v149 = vlog2.pop %v148
      %v150 = vmul.f32 %v149, 0.6931472
      %v151 = vld [vmem:[#allocation2] sm:$0xff]
      %v152 = vadd.f32 %v150, %v151
      %v153 = vld [vmem:[%s1] sm:$0xff]
      %v154 = vsub.f32 %v152, %v153
      %155 = vst.msk [vmem:[%s4] sm:$0xff] %vm142, %v154
    $region29: #{tpu_custom_call.1} parent=1 // pred_fallthru
      _
    // Predicated region
    $region30: #{tpu_custom_call.1} parent=1 // pred_check
      _
    $region31: #{tpu_custom_call.1} parent=1 // pred_check_branch
      %157 = sbr.rel (0) target = $region33
    $region32: #{tpu_custom_call.1} parent=1 // pred_region
      _
    $region33: #{tpu_custom_call.1} parent=1 // pred_fallthru
      _
    // Predicated region
    $region34: #{tpu_custom_call.1} parent=1 // pred_check
      _
    $region35: #{tpu_custom_call.1} parent=1 // pred_check_branch
      %159 = sbr.rel (0) target = $region37
    $region36: #{tpu_custom_call.1} parent=1 // pred_region
      _
    $region37: #{tpu_custom_call.1} parent=1 // pred_fallthru
      _
    %160 = vsyncpa [#allocation5], 1

</llo_original>
